<compile_context>
chip_gen: v7x
topology: tpu7x:2x2x1
jax: 0.10.0
libtpu: 0.0.40
codegen_flags: <defaults>
</compile_context>

<pallas_src>
import functools

import jax
import jax.numpy as jnp
from jax.experimental import pallas as pl
from jax.experimental.pallas import tpu as pltpu


def _mlp_kernel(x_ref, w1_ref, b1_ref, w2_ref, b2_ref, w3_ref, b3_ref, o_ref):
    x = x_ref[...]                                                      # (TB, D)

    # Layer 1: (TB, D) @ (D, 128) on the MXU, f32 accumulate, ReLU on the VPU.
    h1 = jnp.dot(x, w1_ref[...], preferred_element_type=jnp.float32)   # (TB, 128)
    h1 = jnp.maximum(h1 + b1_ref[...], 0.0)

    # Layer 2: (TB, 128) @ (128, 64) on the MXU, f32 accumulate, ReLU.
    h2 = jnp.dot(h1, w2_ref[...], preferred_element_type=jnp.float32)  # (TB, 64)
    h2 = jnp.maximum(h2 + b2_ref[...], 0.0)

    # Layer 3 (64 -> 1): VPU multiply + lane reduce instead of an N=1 MXU matmul.
    # w3 arrives as a (1, 64) row, b3 as an SMEM scalar.
    logit = jnp.sum(h2 * w3_ref[...], axis=-1, keepdims=True) + b3_ref[0]  # (TB, 1)

    # Sigmoid: exp on the EUP, approximate reciprocal also on the EUP.
    sig = pl.reciprocal(1.0 + jnp.exp(-logit), approx=True)            # (TB, 1)

    # Lane-dense, unmasked store: broadcast across the 128-lane padded output.
    o_ref[...] = jnp.broadcast_to(sig, o_ref.shape)                    # (TB, 128)


def news_classifier_forward(x, params, *, block_b=128, use_bf16=False):
    """x: (B, input_dim) float32 -> (B, 1) float32 probabilities."""
    w1, b1, w2, b2, w3, b3 = params
    B, D = x.shape
    H1 = w1.shape[1]
    H2 = w2.shape[1]
    OUT_LANES = 128

    # Kernel-friendly layouts for the tiny final-layer params.
    w3_row = w3.reshape(1, H2).astype(jnp.float32)   # (1, 64) lane row
    b3_s = b3.reshape(1).astype(jnp.float32)         # (1,) SMEM scalar

    if use_bf16:
        # bf16 inputs / first two weight matrices, f32 accumulation in the kernel.
        x = x.astype(jnp.bfloat16)
        w1 = w1.astype(jnp.bfloat16)
        w2 = w2.astype(jnp.bfloat16)

    # Pad the batch to a multiple of the batch tile.
    num_tiles = pl.cdiv(B, block_b)
    b_pad = num_tiles * block_b
    if b_pad != B:
        x = jnp.pad(x, ((0, b_pad - B), (0, 0)))

    flops = 2 * b_pad * (D * H1 + H1 * H2 + H2)
    bytes_accessed = (
        b_pad * D * x.dtype.itemsize
        + D * H1 * w1.dtype.itemsize + H1 * 4
        + H1 * H2 * w2.dtype.itemsize + H2 * 4
        + H2 * 4 + 4
        + b_pad * OUT_LANES * 4
    )
    cost = pl.CostEstimate(
        flops=flops, transcendentals=2 * b_pad, bytes_accessed=bytes_accessed
    )

    grid_spec = pltpu.PrefetchScalarGridSpec(
        num_scalar_prefetch=0,
        grid=(num_tiles,),
        in_specs=[
            pl.BlockSpec((block_b, D), lambda i: (i, 0)),   # x: tiled on batch
            pl.BlockSpec((D, H1), lambda i: (0, 0)),        # w1: VMEM-resident
            pl.BlockSpec((1, H1), lambda i: (0, 0)),        # b1
            pl.BlockSpec((H1, H2), lambda i: (0, 0)),       # w2
            pl.BlockSpec((1, H2), lambda i: (0, 0)),        # b2
            pl.BlockSpec((1, H2), lambda i: (0, 0)),        # w3 row
            pl.BlockSpec(memory_space=pltpu.MemorySpace.SMEM),  # b3 scalar
        ],
        out_specs=pl.BlockSpec((block_b, OUT_LANES), lambda i: (i, 0)),
    )

    out = pl.pallas_call(
        _mlp_kernel,
        out_shape=jax.ShapeDtypeStruct((b_pad, OUT_LANES), jnp.float32),
        grid_spec=grid_spec,
        compiler_params=pltpu.CompilerParams(
            dimension_semantics=("parallel",),   # shard batch tiles across TCs (v7x)
            vmem_limit_bytes=32 * 1024 * 1024,   # safe on v5e/v6e/v7x for these tiles
        ),
        cost_estimate=cost,
    )(x, w1, b1, w2, b2, w3_row, b3_s)

    # Only lane 0 of the padded output carries the logit; drop batch padding.
    return out[:B, :1]


def init_params(key, input_dim):
    """Deterministic synthetic parameters matching nn.Linear shapes (stored (in, out))."""
    k1, k2, k3 = jax.random.split(key, 3)
    w1 = jax.random.normal(k1, (input_dim, 128), jnp.float32) * 0.05
    b1 = jnp.full((1, 128), 0.01, jnp.float32)
    w2 = jax.random.normal(k2, (128, 64), jnp.float32) * 0.05
    b2 = jnp.full((1, 64), 0.01, jnp.float32)
    w3 = jax.random.normal(k3, (64, 1), jnp.float32) * 0.05
    b3 = jnp.full((1, 1), 0.01, jnp.float32)
    return w1, b1, w2, b2, w3, b3


def reference_forward(x, params):
    """Pure-JAX reference for correctness check."""
    w1, b1, w2, b2, w3, b3 = params
    h1 = jnp.maximum(x @ w1 + b1, 0.0)
    h2 = jnp.maximum(h1 @ w2 + b2, 0.0)
    return jax.nn.sigmoid(h2 @ w3 + b3)


if __name__ == "__main__":
    key = jax.random.PRNGKey(0)
    kx, kp = jax.random.split(key)

    batch, input_dim = 200, 128   # non-multiple of the 128-row tile -> exercises padding
    x = jax.random.normal(kx, (batch, input_dim), jnp.float32)
    params = init_params(kp, input_dim)
    ref = reference_forward(x, params)

    fwd = jax.jit(functools.partial(news_classifier_forward, block_b=128, use_bf16=False))
    out = jax.block_until_ready(fwd(x, params))
    assert out.shape == (batch, 1), out.shape
    # approx=True reciprocal -> allow a slightly looser (still tight) tolerance.
    assert jnp.allclose(out, ref, atol=2e-3, rtol=2e-3), "f32 mismatch vs reference"

    # bf16-input path (v6e/v7x MXU-rate + halved x DMA); f32 accumulation inside.
    fwd_bf16 = jax.jit(functools.partial(news_classifier_forward, block_b=128, use_bf16=True))
    out_bf16 = jax.block_until_ready(fwd_bf16(x, params))
    assert out_bf16.shape == (batch, 1), out_bf16.shape
    assert jnp.allclose(out_bf16, ref, atol=3e-2, rtol=3e-2), "bf16 mismatch vs reference"

    print("KERNEL_OK")
</pallas_src>

<mosaic_0001>
module attributes {stable_mosaic.version = 11 : i64} {
  func.func @_mlp_kernel(%arg0: i32, %arg1: memref<128x128xf32, #tpu.memory_space<vmem>>, %arg2: memref<128x128xf32, #tpu.memory_space<vmem>>, %arg3: memref<1x128xf32, #tpu.memory_space<vmem>>, %arg4: memref<128x64xf32, #tpu.memory_space<vmem>>, %arg5: memref<1x64xf32, #tpu.memory_space<vmem>>, %arg6: memref<1x64xf32, #tpu.memory_space<vmem>>, %arg7: memref<1xf32, #tpu.memory_space<smem>>, %arg8: memref<128x128xf32, #tpu.memory_space<vmem>>) attributes {dimension_semantics = [#tpu.dimension_semantics<parallel>], iteration_bounds = array<i64: 2>, scalar_prefetch = 0 : i64, scratch_operands = 0 : i64, tpu.core_type = #tpu.core_type<tc>, window_params = [{transform_indices = @transform_0, window_bounds = array<i64: 128, 128>}, {pipeline_mode = #tpu.pipeline_mode<synchronous>, transform_indices = @transform_1, window_bounds = array<i64: 128, 128>}, {pipeline_mode = #tpu.pipeline_mode<synchronous>, transform_indices = @transform_2, window_bounds = array<i64: 1, 128>}, {pipeline_mode = #tpu.pipeline_mode<synchronous>, transform_indices = @transform_3, window_bounds = array<i64: 128, 64>}, {pipeline_mode = #tpu.pipeline_mode<synchronous>, transform_indices = @transform_4, window_bounds = array<i64: 1, 64>}, {pipeline_mode = #tpu.pipeline_mode<synchronous>, transform_indices = @transform_5, window_bounds = array<i64: 1, 64>}, {transform_indices = @transform_6, window_bounds = array<i64: 1>}, {transform_indices = @transform_7, window_bounds = array<i64: 128, 128>}]} {
    %c0 = arith.constant 0 : index
    %c0_0 = arith.constant 0 : index
    %0 = vector.load %arg1[%c0, %c0_0] : memref<128x128xf32, #tpu.memory_space<vmem>>, vector<128x128xf32>
    %c0_1 = arith.constant 0 : index
    %c0_2 = arith.constant 0 : index
    %1 = vector.load %arg2[%c0_1, %c0_2] : memref<128x128xf32, #tpu.memory_space<vmem>>, vector<128x128xf32>
    %cst = arith.constant dense<0.000000e+00> : vector<128x128xf32>
    %2 = tpu.matmul %0, %1, %cst {dimension_numbers = #tpu.dot_dimension_numbers<[1], [0], [0], [1], [0, 0, 1, 1], [], []>} : vector<128x128xf32>, vector<128x128xf32>, vector<128x128xf32> -> vector<128x128xf32>
    %c0_3 = arith.constant 0 : index
    %c0_4 = arith.constant 0 : index
    %3 = vector.load %arg3[%c0_3, %c0_4] : memref<1x128xf32, #tpu.memory_space<vmem>>, vector<1x128xf32>
    %4 = vector.broadcast %3 : vector<1x128xf32> to vector<128x128xf32>
    %5 = arith.addf %2, %4 : vector<128x128xf32>
    %cst_5 = arith.constant 0.000000e+00 : f32
    %6 = vector.broadcast %cst_5 : f32 to vector<128x128xf32>
    %7 = arith.maximumf %5, %6 : vector<128x128xf32>
    %c0_6 = arith.constant 0 : index
    %c0_7 = arith.constant 0 : index
    %8 = vector.load %arg4[%c0_6, %c0_7] : memref<128x64xf32, #tpu.memory_space<vmem>>, vector<128x64xf32>
    %cst_8 = arith.constant dense<0.000000e+00> : vector<128x64xf32>
    %9 = tpu.matmul %7, %8, %cst_8 {dimension_numbers = #tpu.dot_dimension_numbers<[1], [0], [0], [1], [0, 0, 1, 1], [], []>} : vector<128x128xf32>, vector<128x64xf32>, vector<128x64xf32> -> vector<128x64xf32>
    %c0_9 = arith.constant 0 : index
    %c0_10 = arith.constant 0 : index
    %10 = vector.load %arg5[%c0_9, %c0_10] : memref<1x64xf32, #tpu.memory_space<vmem>>, vector<1x64xf32>
    %11 = vector.broadcast %10 : vector<1x64xf32> to vector<128x64xf32>
    %12 = arith.addf %9, %11 : vector<128x64xf32>
    %cst_11 = arith.constant 0.000000e+00 : f32
    %13 = vector.broadcast %cst_11 : f32 to vector<128x64xf32>
    %14 = arith.maximumf %12, %13 : vector<128x64xf32>
    %c0_12 = arith.constant 0 : index
    %c0_13 = arith.constant 0 : index
    %15 = vector.load %arg6[%c0_12, %c0_13] : memref<1x64xf32, #tpu.memory_space<vmem>>, vector<1x64xf32>
    %16 = vector.broadcast %15 : vector<1x64xf32> to vector<128x64xf32>
    %17 = arith.mulf %14, %16 : vector<128x64xf32>
    %cst_14 = arith.constant dense<0.000000e+00> : vector<128xf32>
    %18 = vector.multi_reduction <add>, %17, %cst_14 [1] : vector<128x64xf32> to vector<128xf32>
    %19 = vector.shape_cast %18 : vector<128xf32> to vector<128x1xf32>
    %c0_15 = arith.constant 0 : index
    %20 = memref.load %arg7[%c0_15] : memref<1xf32, #tpu.memory_space<smem>>
    %21 = vector.broadcast %20 : f32 to vector<128x1xf32>
    %22 = arith.addf %19, %21 : vector<128x1xf32>
    %cst_16 = arith.constant 0.000000e+00 : f32
    %23 = vector.broadcast %cst_16 : f32 to vector<128x1xf32>
    %24 = arith.subf %23, %22 : vector<128x1xf32>
    %25 = math.exp %24 : vector<128x1xf32>
    %cst_17 = arith.constant 1.000000e+00 : f32
    %26 = vector.broadcast %cst_17 : f32 to vector<128x1xf32>
    %27 = arith.addf %26, %25 : vector<128x1xf32>
    %28 = tpu.reciprocal %27 {approx = true} : vector<128x1xf32> -> vector<128x1xf32>
    %29 = vector.shape_cast %28 : vector<128x1xf32> to vector<128x1xf32>
    %30 = vector.broadcast %29 : vector<128x1xf32> to vector<128x128xf32>
    %c0_18 = arith.constant 0 : index
    %c0_19 = arith.constant 0 : index
    %31 = vector.load %arg8[%c0_18, %c0_19] : memref<128x128xf32, #tpu.memory_space<vmem>>, vector<128x128xf32>
    tpu.vector_store %arg8[%c0_18, %c0_19], %30 {strides = array<i32>} : memref<128x128xf32, #tpu.memory_space<vmem>>, vector<128x128xf32>,
    return
  }
  func.func @transform_0(%arg0: i32) -> (i32, i32) {
    %c0_i32 = arith.constant 0 : i32
    %c0_i32_0 = arith.constant 0 : i32
    return %arg0, %c0_i32 : i32, i32
  }
  func.func @transform_1(%arg0: i32) -> (i32, i32) {
    %c0_i32 = arith.constant 0 : i32
    %c0_i32_0 = arith.constant 0 : i32
    %c0_i32_1 = arith.constant 0 : i32
    return %c0_i32, %c0_i32_0 : i32, i32
  }
  func.func @transform_2(%arg0: i32) -> (i32, i32) {
    %c0_i32 = arith.constant 0 : i32
    %c0_i32_0 = arith.constant 0 : i32
    %c0_i32_1 = arith.constant 0 : i32
    return %c0_i32, %c0_i32_0 : i32, i32
  }
  func.func @transform_3(%arg0: i32) -> (i32, i32) {
    %c0_i32 = arith.constant 0 : i32
    %c0_i32_0 = arith.constant 0 : i32
    %c0_i32_1 = arith.constant 0 : i32
    return %c0_i32, %c0_i32_0 : i32, i32
  }
  func.func @transform_4(%arg0: i32) -> (i32, i32) {
    %c0_i32 = arith.constant 0 : i32
    %c0_i32_0 = arith.constant 0 : i32
    %c0_i32_1 = arith.constant 0 : i32
    return %c0_i32, %c0_i32_0 : i32, i32
  }
  func.func @transform_5(%arg0: i32) -> (i32, i32) {
    %c0_i32 = arith.constant 0 : i32
    %c0_i32_0 = arith.constant 0 : i32
    %c0_i32_1 = arith.constant 0 : i32
    return %c0_i32, %c0_i32_0 : i32, i32
  }
  func.func @transform_6(%arg0: i32) -> i32 {
    %c0_i32 = arith.constant 0 : i32
    %c0_i32_0 = arith.constant 0 : i32
    return %c0_i32 : i32
  }
  func.func @transform_7(%arg0: i32) -> (i32, i32) {
    %c0_i32 = arith.constant 0 : i32
    %c0_i32_0 = arith.constant 0 : i32
    return %arg0, %c0_i32 : i32, i32
  }
}

</mosaic_0001>

<llo_original>
// kernel: news_classifier_forward.1
$region0: #{news_classifier_forward.1}
  #allocation0 [shape = 'u32[]', space=smem, size = 0x4, offset = 0x4, fixed_abs, tag = 'smem constant byte address 0x4 - core index']
  #allocation1 [shape = 'u32[144,128]{1,0:T(1,128)}', space=vmem, size = 0x12000, scoped, tag = 'internal scratch']
  #allocation2 [shape = 'f32[1]{0:T(128)S(6)}', space=smem, size = 0x200, scoped, tag = 'scoped memory for news_classifier_forward.1']
  %s0 = inlined_call_operand.vmem [shape: f32[256,128], index: 0, kind: input, shape index: {}]
  %s1 = inlined_call_operand.vmem [shape: f32[128,128], index: 1, kind: input, shape index: {}]
  %s2 = inlined_call_operand.vmem [shape: f32[1,128], index: 2, kind: input, shape index: {}]
  %s3 = inlined_call_operand.vmem [shape: f32[128,64], index: 3, kind: input, shape index: {}]
  %s4 = inlined_call_operand.vmem [shape: f32[1,64], index: 4, kind: input, shape index: {}]
  %s5 = inlined_call_operand.vmem [shape: f32[1,64], index: 5, kind: input, shape index: {}]
  %s6 = inlined_call_operand.<no memory space> [shape: f32[1], index: 6, kind: input, shape index: {}]
  %s7 = inlined_call_operand.vmem [shape: f32[256,128], index: 7, kind: output, shape index: {}]
  %s8 = sld [smem:[#allocation0]]
  $region61: #{news_classifier_forward.1} parent=0
    _
  %s10 = ssub.s32 1, %s8
  %s11 = scalar_select 0, %s10, %s8
  %12 = sst [smem:[#allocation2]] %s6
  loop: start=0, step=1, limit=4
  $region2: #{news_classifier_forward.1} parent=0 // loop_pre_header
    _
  $region3: #{news_classifier_forward.1} parent=0 // loop_header
    %s14 = sphi 0, %s18
    %p15 = scmp.ge.s32.totalorder %s14, 4
    %s24 = sphi 0, %s26
    %s27 = sphi 0, %s24
    %s28 = sphi 0, %s27
    %s44 = sphi 0, %s28
    %s48 = sphi 0, %s48
    %s50 = sphi 0, %s48
    %s51 = sphi 0, %s50
    %s65 = sphi 0, %s51
    %s69 = sphi 0, %s69
    %s71 = sphi 0, %s69
    %s72 = sphi 0, %s71
    %s86 = sphi 0, %s72
    %s90 = sphi 0, %s90
    %s92 = sphi 0, %s90
    %s93 = sphi 0, %s92
    %s107 = sphi 0, %s93
    %s111 = sphi 0, %s111
    %s113 = sphi 0, %s111
    %s114 = sphi 0, %s113
    %s128 = sphi 0, %s114
    %s132 = sphi 0, %s132
    %s134 = sphi 0, %s132
    %s135 = sphi 0, %s134
    %s149 = sphi 0, %s135
    %s153 = sphi 0, %s153
    %s155 = sphi 0, %s153
    %s156 = sphi 0, %s155
    %s170 = sphi 0, %s156
    %s176 = sphi 0, %s178
    %s179 = sphi 0, %s176
    %s180 = sphi 0, %s179
    %s196 = sphi 0, %s180
  $region4: #{news_classifier_forward.1} parent=0 // loop_header_branch
    %17 = sbr.rel (%p15) target = $region8
  $region5: #{news_classifier_forward.1} parent=0 // loop_body
    %s19 = ssub.s32 %s14, 1
    %s20 = ssub.s32 %s14, 2
    %s21 = sadd.s32 %s14, 1
    %s22 = ssub.s32 %s14, %s21
    %p23 = scmp.eq.s32.totalorder %s22, 0
    %s25 = sadd.s32 %s24, 1
    %s26 = scalar_select %p23, %s24, %s25
    %p29 = pneg %p23
    %p30 = scmp.eq.s32.totalorder %s14, 1
    %p31 = por %p29, %p30
    %p32 = scmp.ne.s32.totalorder %s24, %s27
    %p33 = scmp.eq.s32.totalorder %s14, 0
    %p34 = por %p32, %p33
    %p35 = scmp.ne.s32.totalorder %s24, %s27
    %p36 = scmp.eq.s32.totalorder %s19, 1
    %p37 = por %p35, %p36
    %p38 = scmp.ne.s32.totalorder %s27, %s28
    %p39 = scmp.eq.s32.totalorder %s19, 0
    %p40 = por %p38, %p39
    %p41 = scmp.ne.s32.totalorder %s27, %s28
    %p42 = scmp.eq.s32.totalorder %s20, 1
    %p43 = por %p41, %p42
    %p45 = scmp.ne.s32.totalorder %s28, %s44
    %p46 = scmp.eq.s32.totalorder %s20, 0
    %p47 = por %p45, %p46
    %s49 = sadd.s32 %s48, 1
    %p52 = scmp.eq.s32.totalorder %s14, 1
    %p53 = scmp.ne.s32.totalorder %s48, %s50
    %p54 = scmp.eq.s32.totalorder %s14, 0
    %p55 = por %p53, %p54
    %p56 = scmp.ne.s32.totalorder %s48, %s50
    %p57 = scmp.eq.s32.totalorder %s19, 1
    %p58 = por %p56, %p57
    %p59 = scmp.ne.s32.totalorder %s50, %s51
    %p60 = scmp.eq.s32.totalorder %s19, 0
    %p61 = por %p59, %p60
    %p62 = scmp.ne.s32.totalorder %s50, %s51
    %p63 = scmp.eq.s32.totalorder %s20, 1
    %p64 = por %p62, %p63
    %p66 = scmp.ne.s32.totalorder %s51, %s65
    %p67 = scmp.eq.s32.totalorder %s20, 0
    %p68 = por %p66, %p67
    %s70 = sadd.s32 %s69, 1
    %p73 = scmp.eq.s32.totalorder %s14, 1
    %p74 = scmp.ne.s32.totalorder %s69, %s71
    %p75 = scmp.eq.s32.totalorder %s14, 0
    %p76 = por %p74, %p75
    %p77 = scmp.ne.s32.totalorder %s69, %s71
    %p78 = scmp.eq.s32.totalorder %s19, 1
    %p79 = por %p77, %p78
    %p80 = scmp.ne.s32.totalorder %s71, %s72
    %p81 = scmp.eq.s32.totalorder %s19, 0
    %p82 = por %p80, %p81
    %p83 = scmp.ne.s32.totalorder %s71, %s72
    %p84 = scmp.eq.s32.totalorder %s20, 1
    %p85 = por %p83, %p84
    %p87 = scmp.ne.s32.totalorder %s72, %s86
    %p88 = scmp.eq.s32.totalorder %s20, 0
    %p89 = por %p87, %p88
    %s91 = sadd.s32 %s90, 1
    %p94 = scmp.eq.s32.totalorder %s14, 1
    %p95 = scmp.ne.s32.totalorder %s90, %s92
    %p96 = scmp.eq.s32.totalorder %s14, 0
    %p97 = por %p95, %p96
    %p98 = scmp.ne.s32.totalorder %s90, %s92
    %p99 = scmp.eq.s32.totalorder %s19, 1
    %p100 = por %p98, %p99
    %p101 = scmp.ne.s32.totalorder %s92, %s93
    %p102 = scmp.eq.s32.totalorder %s19, 0
    %p103 = por %p101, %p102
    %p104 = scmp.ne.s32.totalorder %s92, %s93
    %p105 = scmp.eq.s32.totalorder %s20, 1
    %p106 = por %p104, %p105
    %p108 = scmp.ne.s32.totalorder %s93, %s107
    %p109 = scmp.eq.s32.totalorder %s20, 0
    %p110 = por %p108, %p109
    %s112 = sadd.s32 %s111, 1
    %p115 = scmp.eq.s32.totalorder %s14, 1
    %p116 = scmp.ne.s32.totalorder %s111, %s113
    %p117 = scmp.eq.s32.totalorder %s14, 0
    %p118 = por %p116, %p117
    %p119 = scmp.ne.s32.totalorder %s111, %s113
    %p120 = scmp.eq.s32.totalorder %s19, 1
    %p121 = por %p119, %p120
    %p122 = scmp.ne.s32.totalorder %s113, %s114
    %p123 = scmp.eq.s32.totalorder %s19, 0
    %p124 = por %p122, %p123
    %p125 = scmp.ne.s32.totalorder %s113, %s114
    %p126 = scmp.eq.s32.totalorder %s20, 1
    %p127 = por %p125, %p126
    %p129 = scmp.ne.s32.totalorder %s114, %s128
    %p130 = scmp.eq.s32.totalorder %s20, 0
    %p131 = por %p129, %p130
    %s133 = sadd.s32 %s132, 1
    %p136 = scmp.eq.s32.totalorder %s14, 1
    %p137 = scmp.ne.s32.totalorder %s132, %s134
    %p138 = scmp.eq.s32.totalorder %s14, 0
    %p139 = por %p137, %p138
    %p140 = scmp.ne.s32.totalorder %s132, %s134
    %p141 = scmp.eq.s32.totalorder %s19, 1
    %p142 = por %p140, %p141
    %p143 = scmp.ne.s32.totalorder %s134, %s135
    %p144 = scmp.eq.s32.totalorder %s19, 0
    %p145 = por %p143, %p144
    %p146 = scmp.ne.s32.totalorder %s134, %s135
    %p147 = scmp.eq.s32.totalorder %s20, 1
    %p148 = por %p146, %p147
    %p150 = scmp.ne.s32.totalorder %s135, %s149
    %p151 = scmp.eq.s32.totalorder %s20, 0
    %p152 = por %p150, %p151
    %s154 = sadd.s32 %s153, 1
    %p157 = scmp.eq.s32.totalorder %s14, 1
    %p158 = scmp.ne.s32.totalorder %s153, %s155
    %p159 = scmp.eq.s32.totalorder %s14, 0
    %p160 = por %p158, %p159
    %p161 = scmp.ne.s32.totalorder %s153, %s155
    %p162 = scmp.eq.s32.totalorder %s19, 1
    %p163 = por %p161, %p162
    %p164 = scmp.ne.s32.totalorder %s155, %s156
    %p165 = scmp.eq.s32.totalorder %s19, 0
    %p166 = por %p164, %p165
    %p167 = scmp.ne.s32.totalorder %s155, %s156
    %p168 = scmp.eq.s32.totalorder %s20, 1
    %p169 = por %p167, %p168
    %p171 = scmp.ne.s32.totalorder %s156, %s170
    %p172 = scmp.eq.s32.totalorder %s20, 0
    %p173 = por %p171, %p172
    %s174 = ssub.s32 %s14, %s21
    %p175 = scmp.eq.s32.totalorder %s174, 0
    %s177 = sadd.s32 %s176, 1
    %s178 = scalar_select %p175, %s176, %s177
    %p181 = pneg %p175
    %p182 = scmp.eq.s32.totalorder %s14, 1
    %p183 = por %p181, %p182
    %p184 = scmp.ne.s32.totalorder %s176, %s179
    %p185 = scmp.eq.s32.totalorder %s14, 0
    %p186 = por %p184, %p185
    %p187 = scmp.ne.s32.totalorder %s176, %s179
    %p188 = scmp.eq.s32.totalorder %s19, 1
    %p189 = por %p187, %p188
    %p190 = scmp.ne.s32.totalorder %s179, %s180
    %p191 = scmp.eq.s32.totalorder %s19, 0
    %p192 = por %p190, %p191
    %p193 = scmp.ne.s32.totalorder %s179, %s180
    %p194 = scmp.eq.s32.totalorder %s20, 1
    %p195 = por %p193, %p194
    %p197 = scmp.ne.s32.totalorder %s180, %s196
    %p198 = scmp.eq.s32.totalorder %s20, 0
    %p199 = por %p197, %p198
    %p200 = scmp.le.s32.totalorder 1, %s14
    %p201 = scmp.lt.s32.totalorder %s14, 3
    %p202 = pnand %p200, %p201
    %p203 = pneg %p202
    // Predicated region
    $region9: #{news_classifier_forward.1} parent=5 // pred_check
      _
    $region10: #{news_classifier_forward.1} parent=5 // pred_check_branch
      %205 = sbr.rel (%p202) target = $region12
    $region11: #{news_classifier_forward.1} parent=5 // pred_region
      %s206 = ssub.s32 %s14, 1
      // Predicated region
      $region13: #{news_classifier_forward.1} parent=11 // pred_check
        %p207 = pneg %p61
      $region14: #{news_classifier_forward.1} parent=11 // pred_check_branch
        %209 = sbr.rel (%p207) target = $region16
      $region15: #{news_classifier_forward.1} parent=11 // pred_region
        _
      $region16: #{news_classifier_forward.1} parent=11 // pred_fallthru
        _
      // Predicated region
      $region17: #{news_classifier_forward.1} parent=11 // pred_check
        %p210 = pneg %p82
      $region18: #{news_classifier_forward.1} parent=11 // pred_check_branch
        %212 = sbr.rel (%p210) target = $region20
      $region19: #{news_classifier_forward.1} parent=11 // pred_region
        _
      $region20: #{news_classifier_forward.1} parent=11 // pred_fallthru
        _
      // Predicated region
      $region21: #{news_classifier_forward.1} parent=11 // pred_check
        %p213 = pneg %p103
      $region22: #{news_classifier_forward.1} parent=11 // pred_check_branch
        %215 = sbr.rel (%p213) target = $region24
      $region23: #{news_classifier_forward.1} parent=11 // pred_region
        _
      $region24: #{news_classifier_forward.1} parent=11 // pred_fallthru
        _
      // Predicated region
      $region25: #{news_classifier_forward.1} parent=11 // pred_check
        %p216 = pneg %p124
      $region26: #{news_classifier_forward.1} parent=11 // pred_check_branch
        %218 = sbr.rel (%p216) target = $region28
      $region27: #{news_classifier_forward.1} parent=11 // pred_region
        _
      $region28: #{news_classifier_forward.1} parent=11 // pred_fallthru
        _
      // Predicated region
      $region29: #{news_classifier_forward.1} parent=11 // pred_check
        %p219 = pneg %p145
      $region30: #{news_classifier_forward.1} parent=11 // pred_check_branch
        %221 = sbr.rel (%p219) target = $region32
      $region31: #{news_classifier_forward.1} parent=11 // pred_region
        _
      $region32: #{news_classifier_forward.1} parent=11 // pred_fallthru
        _
      // Predicated region
      $region33: #{news_classifier_forward.1} parent=11 // pred_check
        %p222 = pneg %p166
      $region34: #{news_classifier_forward.1} parent=11 // pred_check_branch
        %224 = sbr.rel (%p222) target = $region36
      $region35: #{news_classifier_forward.1} parent=11 // pred_region
        _
      $region36: #{news_classifier_forward.1} parent=11 // pred_fallthru
        _
    $region12: #{news_classifier_forward.1} parent=5 // pred_fallthru
      _
    %p225 = scmp.lt.s32.totalorder %s14, 2
    // Predicated region
    $region37: #{news_classifier_forward.1} parent=5 // pred_check
      %p226 = pneg %p225
    $region38: #{news_classifier_forward.1} parent=5 // pred_check_branch
      %228 = sbr.rel (%p226) target = $region40
    $region39: #{news_classifier_forward.1} parent=5 // pred_region
      // Predicated region
      $region41: #{news_classifier_forward.1} parent=39 // pred_check
        %p229 = pneg %p34
      $region42: #{news_classifier_forward.1} parent=39 // pred_check_branch
        %231 = sbr.rel (%p229) target = $region44
      $region43: #{news_classifier_forward.1} parent=39 // pred_region
        %s232 = smul.u32 16, %s14
        %p233 = scmp.lt.s32.totalorder %s232, 31
        %s234 = scalar_select %p233, %s232, 31
        %s235 = smul.addr %s234, 8
        %s236 = scalar_lea.vmem %s0, %s235
        %s237 = smul.u32 16, %s14
      $region44: #{news_classifier_forward.1} parent=39 // pred_fallthru
        _
    $region40: #{news_classifier_forward.1} parent=5 // pred_fallthru
      _
    %p238 = scmp.le.s32.totalorder 1, %s14
    %p239 = scmp.lt.s32.totalorder %s14, 3
    %p240 = pnand %p238, %p239
    %p241 = pneg %p240
    // Predicated region
    $region45: #{news_classifier_forward.1} parent=5 // pred_check
      _
    $region46: #{news_classifier_forward.1} parent=5 // pred_check_branch
      %243 = sbr.rel (%p240) target = $region48
    $region47: #{news_classifier_forward.1} parent=5 // pred_region
      %s244 = ssub.s32 %s14, 1
      %s245 = smul.u32 16, %s19
      %p246 = scmp.lt.s32.totalorder %s245, 31
      %s247 = scalar_select %p246, %s245, 31
      %s248 = smul.addr %s247, 8
      %s249 = scalar_lea.vmem %s0, %s248
      %p250 = pneg %p40
      %p251 = pneg %p37
      %p252 = pneg %p61
      %p253 = pneg %p58
      %p254 = pneg %p82
      %p255 = pneg %p79
      %p256 = pneg %p103
      %p257 = pneg %p100
      %p258 = pneg %p124
      %p259 = pneg %p121
      %p260 = pneg %p145
      %p261 = pneg %p142
      %p262 = pneg %p166
      %p263 = pneg %p163
      %p264 = pneg %p192
      %p265 = pneg %p189
      %s266 = smul.u32 16, %s19
      %p267 = scmp.lt.s32.totalorder %s266, 31
      %s268 = scalar_select %p267, %s266, 31
      %s269 = smul.addr %s268, 8
      %s270 = scalar_lea.vmem %s7, %s269
      %s271 = smul.u32 16, %s19
      %p272 = scmp.lt.s32.totalorder %s271, 31
      %s273 = scalar_select %p272, %s271, 31
      %s274 = smul.addr %s273, 8
      %s275 = scalar_lea.vmem %s0, %s274
      %s276 = smul.u32 16, %s19
      %s277 = smul.u32 16, %s19
      %p278 = scmp.lt.s32.totalorder %s277, 31
      %s279 = scalar_select %p278, %s277, 31
      %s280 = smul.addr %s279, 8
      %s281 = scalar_lea.vmem %s7, %s280
      %s282 = smul.u32 16, %s19
      %v283 = vld [vmem:[%s275] sm:$0xff]
      %v284 = vld [vmem:[%s275 + $0x8] sm:$0xff]
      %v285 = vld [vmem:[%s275 + $0x10] sm:$0xff]
      %v286 = vld [vmem:[%s275 + $0x18] sm:$0xff]
      %v287 = vld [vmem:[%s275 + $0x20] sm:$0xff]
      %v288 = vld [vmem:[%s275 + $0x28] sm:$0xff]
      %v289 = vld [vmem:[%s275 + $0x30] sm:$0xff]
      %v290 = vld [vmem:[%s275 + $0x38] sm:$0xff]
      %v291 = vld [vmem:[%s275 + $0x40] sm:$0xff]
      %v292 = vld [vmem:[%s275 + $0x48] sm:$0xff]
      %v293 = vld [vmem:[%s275 + $0x50] sm:$0xff]
      %v294 = vld [vmem:[%s275 + $0x58] sm:$0xff]
      %v295 = vld [vmem:[%s275 + $0x60] sm:$0xff]
      %v296 = vld [vmem:[%s275 + $0x68] sm:$0xff]
      %v297 = vld [vmem:[%s275 + $0x70] sm:$0xff]
      %v298 = vld [vmem:[%s275 + $0x78] sm:$0xff]
      %v299 = vld [vmem:[%s1] sm:$0xff]
      %v300 = vld [vmem:[%s1 + $0x8] sm:$0xff]
      %v301 = vld [vmem:[%s1 + $0x10] sm:$0xff]
      %v302 = vld [vmem:[%s1 + $0x18] sm:$0xff]
      %v303 = vld [vmem:[%s1 + $0x20] sm:$0xff]
      %v304 = vld [vmem:[%s1 + $0x28] sm:$0xff]
      %v305 = vld [vmem:[%s1 + $0x30] sm:$0xff]
      %v306 = vld [vmem:[%s1 + $0x38] sm:$0xff]
      %v307 = vld [vmem:[%s1 + $0x40] sm:$0xff]
      %v308 = vld [vmem:[%s1 + $0x48] sm:$0xff]
      %v309 = vld [vmem:[%s1 + $0x50] sm:$0xff]
      %v310 = vld [vmem:[%s1 + $0x58] sm:$0xff]
      %v311 = vld [vmem:[%s1 + $0x60] sm:$0xff]
      %v312 = vld [vmem:[%s1 + $0x68] sm:$0xff]
      %v313 = vld [vmem:[%s1 + $0x70] sm:$0xff]
      %v314 = vld [vmem:[%s1 + $0x78] sm:$0xff]
      %v315 = vld [vmem:[%s2] sm:$0x1]
      %v317 = vlaneseq
      %v318 = vshrl.u32 %v317, 7
      %v319 = vsub.s32 0, %v318
      %v320 = vrot.slane %v315, %v319
      %322 = vmatprep.subr.mxu0 0.0
      %323 = vmatpush1.msra.mxu0 %v299
      %324 = vmatprep.subr.mxu0 0.0
      %325 = vmatpush1.msra.mxu0 %v300
      %326 = vmatprep.subr.mxu0 0.0
      %327 = vmatpush1.msra.mxu0 %v301
      %328 = vmatprep.subr.mxu0 0.0
      %329 = vmatpush1.msra.mxu0 %v302
      %330 = vmatprep.subr.mxu0 0.0
      %331 = vmatpush1.msra.mxu0 %v303
      %332 = vmatprep.subr.mxu0 0.0
      %333 = vmatpush1.msra.mxu0 %v304
      %334 = vmatprep.subr.mxu0 0.0
      %335 = vmatpush1.msra.mxu0 %v305
      %336 = vmatprep.subr.mxu0 0.0
      %337 = vmatpush1.msra.mxu0 %v306
      %338 = vmatprep.subr.mxu0 0.0
      %339 = vmatpush1.msra.mxu0 %v307
      %340 = vmatprep.subr.mxu0 0.0
      %341 = vmatpush1.msra.mxu0 %v308
      %342 = vmatprep.subr.mxu0 0.0
      %343 = vmatpush1.msra.mxu0 %v309
      %344 = vmatprep.subr.mxu0 0.0
      %345 = vmatpush1.msra.mxu0 %v310
      %346 = vmatprep.subr.mxu0 0.0
      %347 = vmatpush1.msra.mxu0 %v311
      %348 = vmatprep.subr.mxu0 0.0
      %349 = vmatpush1.msra.mxu0 %v312
      %350 = vmatprep.subr.mxu0 0.0
      %351 = vmatpush1.msra.mxu0 %v313
      %352 = vmatprep.subr.mxu0 0.0
      %353 = vmatpush1.msra.mxu0 %v314
      %354 = vmatprep.subr.mxu0 0.0
      %355 = vmatpush1.msra.mxu0 0.0
      %356 = vmatprep.subr.mxu0 0.0
      %357 = vmatpush1.msra.mxu0 0.0
      %358 = vmatprep.subr.mxu0 0.0
      %359 = vmatpush1.msra.mxu0 0.0
      %360 = vmatprep.subr.mxu0 0.0
      %361 = vmatpush1.msra.mxu0 0.0
      %362 = vmatprep.subr.mxu0 0.0
      %363 = vmatpush1.msra.mxu0 0.0
      %364 = vmatprep.subr.mxu0 0.0
      %365 = vmatpush1.msra.mxu0 0.0
      %366 = vmatprep.subr.mxu0 0.0
      %367 = vmatpush1.msra.mxu0 0.0
      %368 = vmatprep.subr.mxu0 0.0
      %369 = vmatpush1.msra.mxu0 0.0
      %370 = vmatprep.subr.mxu0 0.0
      %371 = vmatpush1.msra.mxu0 0.0
      %372 = vmatprep.subr.mxu0 0.0
      %373 = vmatpush1.msra.mxu0 0.0
      %374 = vmatprep.subr.mxu0 0.0
      %375 = vmatpush1.msra.mxu0 0.0
      %376 = vmatprep.subr.mxu0 0.0
      %377 = vmatpush1.msra.mxu0 0.0
      %378 = vmatprep.subr.mxu0 0.0
      %379 = vmatpush1.msra.mxu0 0.0
      %380 = vmatprep.subr.mxu0 0.0
      %381 = vmatpush1.msra.mxu0 0.0
      %382 = vmatprep.subr.mxu0 0.0
      %383 = vmatpush1.msra.mxu0 0.0
      %384 = vmatprep.subr.mxu0 0.0
      %385 = vmatpush1.msra.mxu0 0.0
      %386 = vmatprep.mubr.f32.mxu0 0.0
      %387 = vmatmul.mubr.f32.gmra.mrb[0].mxu0 %v283
      %v388 = vpop.f32.mrb[0].mxu0
      %v389 = vadd.f32 %v320, %v388
      %v390 = vpop.f32.mrb[0].mxu0
      %391 = vmatprep.mubr.f32.mxu0 0.0
      %392 = vmatmul.mubr.f32.gmra.mrb[0].mxu0 %v284
      %v393 = vpop.f32.mrb[0].mxu0
      %v394 = vadd.f32 %v320, %v393
      %v395 = vpop.f32.mrb[0].mxu0
      %396 = vmatprep.mubr.f32.mxu0 0.0
      %397 = vmatmul.mubr.f32.gmra.mrb[0].mxu0 %v285
      %v398 = vpop.f32.mrb[0].mxu0
      %v399 = vadd.f32 %v320, %v398
      %v400 = vpop.f32.mrb[0].mxu0
      %401 = vmatprep.mubr.f32.mxu0 0.0
      %402 = vmatmul.mubr.f32.gmra.mrb[0].mxu0 %v286
      %v403 = vpop.f32.mrb[0].mxu0
      %v404 = vadd.f32 %v320, %v403
      %v405 = vpop.f32.mrb[0].mxu0
      %406 = vmatprep.mubr.f32.mxu0 0.0
      %407 = vmatmul.mubr.f32.gmra.mrb[0].mxu0 %v287
      %v408 = vpop.f32.mrb[0].mxu0
      %v409 = vadd.f32 %v320, %v408
      %v410 = vpop.f32.mrb[0].mxu0
      %411 = vmatprep.mubr.f32.mxu0 0.0
      %412 = vmatmul.mubr.f32.gmra.mrb[0].mxu0 %v288
      %v413 = vpop.f32.mrb[0].mxu0
      %v414 = vadd.f32 %v320, %v413
      %v415 = vpop.f32.mrb[0].mxu0
      %416 = vmatprep.mubr.f32.mxu0 0.0
      %417 = vmatmul.mubr.f32.gmra.mrb[0].mxu0 %v289
      %v418 = vpop.f32.mrb[0].mxu0
      %v419 = vadd.f32 %v320, %v418
      %v420 = vpop.f32.mrb[0].mxu0
      %421 = vmatprep.mubr.f32.mxu0 0.0
      %422 = vmatmul.mubr.f32.gmra.mrb[0].mxu0 %v290
      %v423 = vpop.f32.mrb[0].mxu0
      %v424 = vadd.f32 %v320, %v423
      %v425 = vpop.f32.mrb[0].mxu0
      %426 = vmatprep.mubr.f32.mxu0 0.0
      %427 = vmatmul.mubr.f32.gmra.mrb[0].mxu0 %v291
      %v428 = vpop.f32.mrb[0].mxu0
      %v429 = vadd.f32 %v320, %v428
      %v430 = vpop.f32.mrb[0].mxu0
      %431 = vmatprep.mubr.f32.mxu0 0.0
      %432 = vmatmul.mubr.f32.gmra.mrb[0].mxu0 %v292
      %v433 = vpop.f32.mrb[0].mxu0
      %v434 = vadd.f32 %v320, %v433
      %v435 = vpop.f32.mrb[0].mxu0
      %436 = vmatprep.mubr.f32.mxu0 0.0
      %437 = vmatmul.mubr.f32.gmra.mrb[0].mxu0 %v293
      %v438 = vpop.f32.mrb[0].mxu0
      %v439 = vadd.f32 %v320, %v438
      %v440 = vpop.f32.mrb[0].mxu0
      %441 = vmatprep.mubr.f32.mxu0 0.0
      %442 = vmatmul.mubr.f32.gmra.mrb[0].mxu0 %v294
      %v443 = vpop.f32.mrb[0].mxu0
      %v444 = vadd.f32 %v320, %v443
      %v445 = vpop.f32.mrb[0].mxu0
      %446 = vmatprep.mubr.f32.mxu0 0.0
      %447 = vmatmul.mubr.f32.gmra.mrb[0].mxu0 %v295
      %v448 = vpop.f32.mrb[0].mxu0
      %v449 = vadd.f32 %v320, %v448
      %v450 = vpop.f32.mrb[0].mxu0
      %451 = vmatprep.mubr.f32.mxu0 0.0
      %452 = vmatmul.mubr.f32.gmra.mrb[0].mxu0 %v296
      %v453 = vpop.f32.mrb[0].mxu0
      %v454 = vadd.f32 %v320, %v453
      %v455 = vpop.f32.mrb[0].mxu0
      %456 = vmatprep.mubr.f32.mxu0 0.0
      %457 = vmatmul.mubr.f32.gmra.mrb[0].mxu0 %v297
      %v458 = vpop.f32.mrb[0].mxu0
      %v459 = vadd.f32 %v320, %v458
      %v460 = vpop.f32.mrb[0].mxu0
      %461 = vmatprep.mubr.f32.mxu0 0.0
      %462 = vmatmul.mubr.f32.gmra.mrb[0].mxu0 %v298
      %v463 = vpop.f32.mrb[0].mxu0
      %v464 = vadd.f32 %v320, %v463
      %v465 = vpop.f32.mrb[0].mxu0
      %466 = vdwg.mxu0
      %v467 = vmax.f32 %v389, 0.0
      %v468 = vmax.f32 %v394, 0.0
      %v469 = vmax.f32 %v399, 0.0
      %v470 = vmax.f32 %v404, 0.0
      %v471 = vmax.f32 %v409, 0.0
      %v472 = vmax.f32 %v414, 0.0
      %v473 = vmax.f32 %v419, 0.0
      %v474 = vmax.f32 %v424, 0.0
      %v475 = vmax.f32 %v429, 0.0
      %v476 = vmax.f32 %v434, 0.0
      %v477 = vmax.f32 %v439, 0.0
      %v478 = vmax.f32 %v444, 0.0
      %v479 = vmax.f32 %v449, 0.0
      %v480 = vmax.f32 %v454, 0.0
      %v481 = vmax.f32 %v459, 0.0
      %v482 = vmax.f32 %v464, 0.0
      %v483 = vld [vmem:[%s3] sm:$0xff]
      %v484 = vld [vmem:[%s3 + $0x8] sm:$0xff]
      %v485 = vld [vmem:[%s3 + $0x10] sm:$0xff]
      %v486 = vld [vmem:[%s3 + $0x18] sm:$0xff]
      %v487 = vld [vmem:[%s3 + $0x20] sm:$0xff]
      %v488 = vld [vmem:[%s3 + $0x28] sm:$0xff]
      %v489 = vld [vmem:[%s3 + $0x30] sm:$0xff]
      %v490 = vld [vmem:[%s3 + $0x38] sm:$0xff]
      %v491 = vld [vmem:[%s3 + $0x40] sm:$0xff]
      %v492 = vld [vmem:[%s3 + $0x48] sm:$0xff]
      %v493 = vld [vmem:[%s3 + $0x50] sm:$0xff]
      %v494 = vld [vmem:[%s3 + $0x58] sm:$0xff]
      %v495 = vld [vmem:[%s3 + $0x60] sm:$0xff]
      %v496 = vld [vmem:[%s3 + $0x68] sm:$0xff]
      %v497 = vld [vmem:[%s3 + $0x70] sm:$0xff]
      %v498 = vld [vmem:[%s3 + $0x78] sm:$0xff]
      %v499 = vld [vmem:[%s4] sm:$0x1]
      %v501 = vlaneseq
      %v502 = vshrl.u32 %v501, 7
      %v503 = vsub.s32 0, %v502
      %v504 = vrot.slane %v499, %v503
      %506 = vmatprep.subr.mxu0 0.0
      %507 = vmatpush1.msra.mxu0 %v483
      %508 = vmatprep.subr.mxu0 0.0
      %509 = vmatpush1.msra.mxu0 %v484
      %510 = vmatprep.subr.mxu0 0.0
      %511 = vmatpush1.msra.mxu0 %v485
      %512 = vmatprep.subr.mxu0 0.0
      %513 = vmatpush1.msra.mxu0 %v486
      %514 = vmatprep.subr.mxu0 0.0
      %515 = vmatpush1.msra.mxu0 %v487
      %516 = vmatprep.subr.mxu0 0.0
      %517 = vmatpush1.msra.mxu0 %v488
      %518 = vmatprep.subr.mxu0 0.0
      %519 = vmatpush1.msra.mxu0 %v489
      %520 = vmatprep.subr.mxu0 0.0
      %521 = vmatpush1.msra.mxu0 %v490
      %522 = vmatprep.subr.mxu0 0.0
      %523 = vmatpush1.msra.mxu0 %v491
      %524 = vmatprep.subr.mxu0 0.0
      %525 = vmatpush1.msra.mxu0 %v492
      %526 = vmatprep.subr.mxu0 0.0
      %527 = vmatpush1.msra.mxu0 %v493
      %528 = vmatprep.subr.mxu0 0.0
      %529 = vmatpush1.msra.mxu0 %v494
      %530 = vmatprep.subr.mxu0 0.0
      %531 = vmatpush1.msra.mxu0 %v495
      %532 = vmatprep.subr.mxu0 0.0
      %533 = vmatpush1.msra.mxu0 %v496
      %534 = vmatprep.subr.mxu0 0.0
      %535 = vmatpush1.msra.mxu0 %v497
      %536 = vmatprep.subr.mxu0 0.0
      %537 = vmatpush1.msra.mxu0 %v498
      %538 = vmatprep.subr.mxu0 0.0
      %539 = vmatpush1.msra.mxu0 0.0
      %540 = vmatprep.subr.mxu0 0.0
      %541 = vmatpush1.msra.mxu0 0.0
      %542 = vmatprep.subr.mxu0 0.0
      %543 = vmatpush1.msra.mxu0 0.0
      %544 = vmatprep.subr.mxu0 0.0
      %545 = vmatpush1.msra.mxu0 0.0
      %546 = vmatprep.subr.mxu0 0.0
      %547 = vmatpush1.msra.mxu0 0.0
      %548 = vmatprep.subr.mxu0 0.0
      %549 = vmatpush1.msra.mxu0 0.0
      %550 = vmatprep.subr.mxu0 0.0
      %551 = vmatpush1.msra.mxu0 0.0
      %552 = vmatprep.subr.mxu0 0.0
      %553 = vmatpush1.msra.mxu0 0.0
      %554 = vmatprep.subr.mxu0 0.0
      %555 = vmatpush1.msra.mxu0 0.0
      %556 = vmatprep.subr.mxu0 0.0
      %557 = vmatpush1.msra.mxu0 0.0
      %558 = vmatprep.subr.mxu0 0.0
      %559 = vmatpush1.msra.mxu0 0.0
      %560 = vmatprep.subr.mxu0 0.0
      %561 = vmatpush1.msra.mxu0 0.0
      %562 = vmatprep.subr.mxu0 0.0
      %563 = vmatpush1.msra.mxu0 0.0
      %564 = vmatprep.subr.mxu0 0.0
      %565 = vmatpush1.msra.mxu0 0.0
      %566 = vmatprep.subr.mxu0 0.0
      %567 = vmatpush1.msra.mxu0 0.0
      %568 = vmatprep.subr.mxu0 0.0
      %569 = vmatpush1.msra.mxu0 0.0
      %570 = vmatprep.mubr.f32.mxu0 0.0
      %571 = vmatmul.mubr.f32.gmra.mrb[0].mxu0 %v467
      %v572 = vpop.f32.mrb[0].mxu0
      %v573 = vadd.f32 %v504, %v572
      %v574 = vpop.f32.mrb[0].mxu0
      %575 = vmatprep.mubr.f32.mxu0 0.0
      %576 = vmatmul.mubr.f32.gmra.mrb[0].mxu0 %v468
      %v577 = vpop.f32.mrb[0].mxu0
      %v578 = vadd.f32 %v504, %v577
      %v579 = vpop.f32.mrb[0].mxu0
      %580 = vmatprep.mubr.f32.mxu0 0.0
      %581 = vmatmul.mubr.f32.gmra.mrb[0].mxu0 %v469
      %v582 = vpop.f32.mrb[0].mxu0
      %v583 = vadd.f32 %v504, %v582
      %v584 = vpop.f32.mrb[0].mxu0
      %585 = vmatprep.mubr.f32.mxu0 0.0
      %586 = vmatmul.mubr.f32.gmra.mrb[0].mxu0 %v470
      %v587 = vpop.f32.mrb[0].mxu0
      %v588 = vadd.f32 %v504, %v587
      %v589 = vpop.f32.mrb[0].mxu0
      %590 = vmatprep.mubr.f32.mxu0 0.0
      %591 = vmatmul.mubr.f32.gmra.mrb[0].mxu0 %v471
      %v592 = vpop.f32.mrb[0].mxu0
      %v593 = vadd.f32 %v504, %v592
      %v594 = vpop.f32.mrb[0].mxu0
      %595 = vmatprep.mubr.f32.mxu0 0.0
      %596 = vmatmul.mubr.f32.gmra.mrb[0].mxu0 %v472
      %v597 = vpop.f32.mrb[0].mxu0
      %v598 = vadd.f32 %v504, %v597
      %v599 = vpop.f32.mrb[0].mxu0
      %600 = vmatprep.mubr.f32.mxu0 0.0
      %601 = vmatmul.mubr.f32.gmra.mrb[0].mxu0 %v473
      %v602 = vpop.f32.mrb[0].mxu0
      %v603 = vadd.f32 %v504, %v602
      %v604 = vpop.f32.mrb[0].mxu0
      %605 = vmatprep.mubr.f32.mxu0 0.0
      %606 = vmatmul.mubr.f32.gmra.mrb[0].mxu0 %v474
      %v607 = vpop.f32.mrb[0].mxu0
      %v608 = vadd.f32 %v504, %v607
      %v609 = vpop.f32.mrb[0].mxu0
      %610 = vmatprep.mubr.f32.mxu0 0.0
      %611 = vmatmul.mubr.f32.gmra.mrb[0].mxu0 %v475
      %v612 = vpop.f32.mrb[0].mxu0
      %v613 = vadd.f32 %v504, %v612
      %v614 = vpop.f32.mrb[0].mxu0
      %615 = vmatprep.mubr.f32.mxu0 0.0
      %616 = vmatmul.mubr.f32.gmra.mrb[0].mxu0 %v476
      %v617 = vpop.f32.mrb[0].mxu0
      %v618 = vadd.f32 %v504, %v617
      %v619 = vpop.f32.mrb[0].mxu0
      %620 = vmatprep.mubr.f32.mxu0 0.0
      %621 = vmatmul.mubr.f32.gmra.mrb[0].mxu0 %v477
      %v622 = vpop.f32.mrb[0].mxu0
      %v623 = vadd.f32 %v504, %v622
      %v624 = vpop.f32.mrb[0].mxu0
      %625 = vmatprep.mubr.f32.mxu0 0.0
      %626 = vmatmul.mubr.f32.gmra.mrb[0].mxu0 %v478
      %v627 = vpop.f32.mrb[0].mxu0
      %v628 = vadd.f32 %v504, %v627
      %v629 = vpop.f32.mrb[0].mxu0
      %630 = vmatprep.mubr.f32.mxu0 0.0
      %631 = vmatmul.mubr.f32.gmra.mrb[0].mxu0 %v479
      %v632 = vpop.f32.mrb[0].mxu0
      %v633 = vadd.f32 %v504, %v632
      %v634 = vpop.f32.mrb[0].mxu0
      %635 = vmatprep.mubr.f32.mxu0 0.0
      %636 = vmatmul.mubr.f32.gmra.mrb[0].mxu0 %v480
      %v637 = vpop.f32.mrb[0].mxu0
      %v638 = vadd.f32 %v504, %v637
      %v639 = vpop.f32.mrb[0].mxu0
      %640 = vmatprep.mubr.f32.mxu0 0.0
      %641 = vmatmul.mubr.f32.gmra.mrb[0].mxu0 %v481
      %v642 = vpop.f32.mrb[0].mxu0
      %v643 = vadd.f32 %v504, %v642
      %v644 = vpop.f32.mrb[0].mxu0
      %645 = vmatprep.mubr.f32.mxu0 0.0
      %646 = vmatmul.mubr.f32.gmra.mrb[0].mxu0 %v482
      %v647 = vpop.f32.mrb[0].mxu0
      %v648 = vadd.f32 %v504, %v647
      %v649 = vpop.f32.mrb[0].mxu0
      %650 = vdwg.mxu0
      %v651 = vmax.f32 %v573, 0.0
      %v652 = vmax.f32 %v578, 0.0
      %v653 = vmax.f32 %v583, 0.0
      %v654 = vmax.f32 %v588, 0.0
      %v655 = vmax.f32 %v593, 0.0
      %v656 = vmax.f32 %v598, 0.0
      %v657 = vmax.f32 %v603, 0.0
      %v658 = vmax.f32 %v608, 0.0
      %v659 = vmax.f32 %v613, 0.0
      %v660 = vmax.f32 %v618, 0.0
      %v661 = vmax.f32 %v623, 0.0
      %v662 = vmax.f32 %v628, 0.0
      %v663 = vmax.f32 %v633, 0.0
      %v664 = vmax.f32 %v638, 0.0
      %v665 = vmax.f32 %v643, 0.0
      %v666 = vmax.f32 %v648, 0.0
      %v667 = vld [vmem:[%s5] sm:$0x1]
      %v669 = vlaneseq
      %v670 = vshrl.u32 %v669, 7
      %v671 = vsub.s32 0, %v670
      %v672 = vrot.slane %v667, %v671
      %v674 = vmul.f32 %v651, %v672
      %v675 = vmul.f32 %v652, %v672
      %v676 = vmul.f32 %v653, %v672
      %v677 = vmul.f32 %v654, %v672
      %v678 = vmul.f32 %v655, %v672
      %v679 = vmul.f32 %v656, %v672
      %v680 = vmul.f32 %v657, %v672
      %v681 = vmul.f32 %v658, %v672
      %v682 = vmul.f32 %v659, %v672
      %v683 = vmul.f32 %v660, %v672
      %v684 = vmul.f32 %v661, %v672
      %v685 = vmul.f32 %v662, %v672
      %v686 = vmul.f32 %v663, %v672
      %v687 = vmul.f32 %v664, %v672
      %v688 = vmul.f32 %v665, %v672
      %v689 = vmul.f32 %v666, %v672
      %vm690 = vcmask 523264
      %v691 = vsel %vm690, %v674, 0.0
      %692 = vadd.xlane.f32.xlu0 %v691
      %v693 = vpop.xlane.xlu0 %692
      %v694 = vsel %vm690, %v675, 0.0
      %695 = vadd.xlane.f32.xlu0 %v694
      %v696 = vpop.xlane.xlu0 %695
      %v697 = vsel %vm690, %v676, 0.0
      %698 = vadd.xlane.f32.xlu0 %v697
      %v699 = vpop.xlane.xlu0 %698
      %v700 = vsel %vm690, %v677, 0.0
      %701 = vadd.xlane.f32.xlu0 %v700
      %v702 = vpop.xlane.xlu0 %701
      %v703 = vsel %vm690, %v678, 0.0
      %704 = vadd.xlane.f32.xlu0 %v703
      %v705 = vpop.xlane.xlu0 %704
      %v706 = vsel %vm690, %v679, 0.0
      %707 = vadd.xlane.f32.xlu0 %v706
      %v708 = vpop.xlane.xlu0 %707
      %v709 = vsel %vm690, %v680, 0.0
      %710 = vadd.xlane.f32.xlu0 %v709
      %v711 = vpop.xlane.xlu0 %710
      %v712 = vsel %vm690, %v681, 0.0
      %713 = vadd.xlane.f32.xlu0 %v712
      %v714 = vpop.xlane.xlu0 %713
      %v715 = vsel %vm690, %v682, 0.0
      %716 = vadd.xlane.f32.xlu0 %v715
      %v717 = vpop.xlane.xlu0 %716
      %v718 = vsel %vm690, %v683, 0.0
      %719 = vadd.xlane.f32.xlu0 %v718
      %v720 = vpop.xlane.xlu0 %719
      %v721 = vsel %vm690, %v684, 0.0
      %722 = vadd.xlane.f32.xlu0 %v721
      %v723 = vpop.xlane.xlu0 %722
      %v724 = vsel %vm690, %v685, 0.0
      %725 = vadd.xlane.f32.xlu0 %v724
      %v726 = vpop.xlane.xlu0 %725
      %v727 = vsel %vm690, %v686, 0.0
      %728 = vadd.xlane.f32.xlu0 %v727
      %v729 = vpop.xlane.xlu0 %728
      %v730 = vsel %vm690, %v687, 0.0
      %731 = vadd.xlane.f32.xlu0 %v730
      %v732 = vpop.xlane.xlu0 %731
      %v733 = vsel %vm690, %v688, 0.0
      %734 = vadd.xlane.f32.xlu0 %v733
      %v735 = vpop.xlane.xlu0 %734
      %v736 = vsel %vm690, %v689, 0.0
      %737 = vadd.xlane.f32.xlu0 %v736
      %v738 = vpop.xlane.xlu0 %737
      %s739 = sld [smem:[#allocation2]]
      %v740 = vstv %s739
      %v741 = vadd.f32 %v693, %v740
      %v742 = vadd.f32 %v696, %v740
      %v743 = vadd.f32 %v699, %v740
      %v744 = vadd.f32 %v702, %v740
      %v745 = vadd.f32 %v705, %v740
      %v746 = vadd.f32 %v708, %v740
      %v747 = vadd.f32 %v711, %v740
      %v748 = vadd.f32 %v714, %v740
      %v749 = vadd.f32 %v717, %v740
      %v750 = vadd.f32 %v720, %v740
      %v751 = vadd.f32 %v723, %v740
      %v752 = vadd.f32 %v726, %v740
      %v753 = vadd.f32 %v729, %v740
      %v754 = vadd.f32 %v732, %v740
      %v755 = vadd.f32 %v735, %v740
      %v756 = vadd.f32 %v738, %v740
      %v757 = vsub.f32 0.0, %v741
      %v758 = vsub.f32 0.0, %v742
      %v759 = vsub.f32 0.0, %v743
      %v760 = vsub.f32 0.0, %v744
      %v761 = vsub.f32 0.0, %v745
      %v762 = vsub.f32 0.0, %v746
      %v763 = vsub.f32 0.0, %v747
      %v764 = vsub.f32 0.0, %v748
      %v765 = vsub.f32 0.0, %v749
      %v766 = vsub.f32 0.0, %v750
      %v767 = vsub.f32 0.0, %v751
      %v768 = vsub.f32 0.0, %v752
      %v769 = vsub.f32 0.0, %v753
      %v770 = vsub.f32 0.0, %v754
      %v771 = vsub.f32 0.0, %v755
      %v772 = vsub.f32 0.0, %v756
      %v773 = vmul.f32 %v757, 1.442695
      %v774 = vpow.pop %v773
      %v775 = vmul.f32 %v758, 1.442695
      %v776 = vpow.pop %v775
      %v777 = vmul.f32 %v759, 1.442695
      %v778 = vpow.pop %v777
      %v779 = vmul.f32 %v760, 1.442695
      %v780 = vpow.pop %v779
      %v781 = vmul.f32 %v761, 1.442695
      %v782 = vpow.pop %v781
      %v783 = vmul.f32 %v762, 1.442695
      %v784 = vpow.pop %v783
      %v785 = vmul.f32 %v763, 1.442695
      %v786 = vpow.pop %v785
      %v787 = vmul.f32 %v764, 1.442695
      %v788 = vpow.pop %v787
      %v789 = vmul.f32 %v765, 1.442695
      %v790 = vpow.pop %v789
      %v791 = vmul.f32 %v766, 1.442695
      %v792 = vpow.pop %v791
      %v793 = vmul.f32 %v767, 1.442695
      %v794 = vpow.pop %v793
      %v795 = vmul.f32 %v768, 1.442695
      %v796 = vpow.pop %v795
      %v797 = vmul.f32 %v769, 1.442695
      %v798 = vpow.pop %v797
      %v799 = vmul.f32 %v770, 1.442695
      %v800 = vpow.pop %v799
      %v801 = vmul.f32 %v771, 1.442695
      %v802 = vpow.pop %v801
      %v803 = vmul.f32 %v772, 1.442695
      %v804 = vpow.pop %v803
      %v805 = vadd.f32 %v774, 1.0
      %v806 = vadd.f32 %v776, 1.0
      %v807 = vadd.f32 %v778, 1.0
      %v808 = vadd.f32 %v780, 1.0
      %v809 = vadd.f32 %v782, 1.0
      %v810 = vadd.f32 %v784, 1.0
      %v811 = vadd.f32 %v786, 1.0
      %v812 = vadd.f32 %v788, 1.0
      %v813 = vadd.f32 %v790, 1.0
      %v814 = vadd.f32 %v792, 1.0
      %v815 = vadd.f32 %v794, 1.0
      %v816 = vadd.f32 %v796, 1.0
      %v817 = vadd.f32 %v798, 1.0
      %v818 = vadd.f32 %v800, 1.0
      %v819 = vadd.f32 %v802, 1.0
      %v820 = vadd.f32 %v804, 1.0
      %v821 = vrcp.pop %v805
      %v822 = vrcp.pop %v806
      %v823 = vrcp.pop %v807
      %v824 = vrcp.pop %v808
      %v825 = vrcp.pop %v809
      %v826 = vrcp.pop %v810
      %v827 = vrcp.pop %v811
      %v828 = vrcp.pop %v812
      %v829 = vrcp.pop %v813
      %v830 = vrcp.pop %v814
      %v831 = vrcp.pop %v815
      %v832 = vrcp.pop %v816
      %v833 = vrcp.pop %v817
      %v834 = vrcp.pop %v818
      %v835 = vrcp.pop %v819
      %v836 = vrcp.pop %v820
      %837 = vst [vmem:[%s281] sm:$0xff] %v821
      %838 = vst [vmem:[%s281 + $0x8] sm:$0xff] %v822
      %839 = vst [vmem:[%s281 + $0x10] sm:$0xff] %v823
      %840 = vst [vmem:[%s281 + $0x18] sm:$0xff] %v824
      %841 = vst [vmem:[%s281 + $0x20] sm:$0xff] %v825
      %842 = vst [vmem:[%s281 + $0x28] sm:$0xff] %v826
      %843 = vst [vmem:[%s281 + $0x30] sm:$0xff] %v827
      %844 = vst [vmem:[%s281 + $0x38] sm:$0xff] %v828
      %845 = vst [vmem:[%s281 + $0x40] sm:$0xff] %v829
      %846 = vst [vmem:[%s281 + $0x48] sm:$0xff] %v830
      %847 = vst [vmem:[%s281 + $0x50] sm:$0xff] %v831
      %848 = vst [vmem:[%s281 + $0x58] sm:$0xff] %v832
      %849 = vst [vmem:[%s281 + $0x60] sm:$0xff] %v833
      %850 = vst [vmem:[%s281 + $0x68] sm:$0xff] %v834
      %851 = vst [vmem:[%s281 + $0x70] sm:$0xff] %v835
      %852 = vst [vmem:[%s281 + $0x78] sm:$0xff] %v836
      %s853 = smul.u32 16, %s19
      %p854 = scmp.lt.s32.totalorder %s853, 31
      %s855 = scalar_select %p854, %s853, 31
      %s856 = smul.addr %s855, 8
      %s857 = scalar_lea.vmem %s7, %s856
      // Predicated region
      $region49: #{news_classifier_forward.1} parent=47 // pred_check
        %p858 = pneg %p189
      $region50: #{news_classifier_forward.1} parent=47 // pred_check_branch
        %860 = sbr.rel (%p858) target = $region52
      $region51: #{news_classifier_forward.1} parent=47 // pred_region
        %s861 = smul.u32 16, %s19
      $region52: #{news_classifier_forward.1} parent=47 // pred_fallthru
        _
    $region48: #{news_classifier_forward.1} parent=5 // pred_fallthru
      _
    %p862 = scmp.le.s32.totalorder 2, %s14
    // Predicated region
    $region53: #{news_classifier_forward.1} parent=5 // pred_check
      %p863 = pneg %p862
    $region54: #{news_classifier_forward.1} parent=5 // pred_check_branch
      %865 = sbr.rel (%p863) target = $region56
    $region55: #{news_classifier_forward.1} parent=5 // pred_region
      %s866 = ssub.s32 %s14, 2
      // Predicated region
      $region57: #{news_classifier_forward.1} parent=55 // pred_check
        %p867 = pneg %p195
      $region58: #{news_classifier_forward.1} parent=55 // pred_check_branch
        %869 = sbr.rel (%p867) target = $region60
      $region59: #{news_classifier_forward.1} parent=55 // pred_region
        %s870 = smul.u32 16, %s20
        %p871 = scmp.lt.s32.totalorder %s870, 31
        %s872 = scalar_select %p871, %s870, 31
        %s873 = smul.addr %s872, 8
        %s874 = scalar_lea.vmem %s7, %s873
      $region60: #{news_classifier_forward.1} parent=55 // pred_fallthru
        _
    $region56: #{news_classifier_forward.1} parent=5 // pred_fallthru
      _
  $region6: #{news_classifier_forward.1} parent=0 // loop_footer
    %s18 = sadd.s32 1, %s14
  $region7: #{news_classifier_forward.1} parent=0 // loop_footer_branch
    %13 = sbr.rel target = $region3
  $region8: #{news_classifier_forward.1} parent=0 // loop_exit
    _

</llo_original>
